<compile_context>
chip_gen: v6e
topology: v6e:2x2x1
jax: 0.10.0
libtpu: 0.0.40
codegen_flags: <defaults>
</compile_context>

<pallas_src>
import jax
import jax.numpy as jnp
from jax.experimental import pallas as pl
from jax.experimental.pallas import tpu as pltpu


def _round_up(x, m):
    return ((x + m - 1) // m) * m


# ---------------------------------------------------------------------------
# Kernel body: one (tm, tn) logits tile, K reduced over the innermost axis.
# ---------------------------------------------------------------------------
def _linear_kernel(x_ref, w_ref, b_ref, o_ref, acc_ref):
    # x_ref: (tm, tk)  w_ref: (tk, tn)  b_ref: (1, tn)  o_ref: (tm, tn)
    # acc_ref: (tm, tn) f32 scratch, persists across the 'arbitrary' K axis.
    k = pl.program_id(2)

    @pl.when(k == 0)
    def _init():
        acc_ref[...] = jnp.zeros_like(acc_ref)

    acc_ref[...] += jnp.dot(x_ref[...], w_ref[...],
                            preferred_element_type=jnp.float32)

    @pl.when(k == pl.num_programs(2) - 1)
    def _finalize():
        o_ref[...] = (acc_ref[...]
                      + b_ref[...].astype(jnp.float32)).astype(o_ref.dtype)


# ---------------------------------------------------------------------------
# Generation-aware sizing helpers
# ---------------------------------------------------------------------------
def _vmem_capacity_bytes():
    try:
        cap = getattr(pltpu.get_tpu_info(), "vmem_capacity_bytes", None)
        if cap:
            return int(cap)
    except Exception:
        pass
    return 64 * 1024 * 1024  # conservative (v7x-sized) fallback


def _tile_footprint(tm, tn, tk, in_isz, out_isz):
    # double-buffered x, w, out blocks + bias + f32 accumulator scratch
    return (2 * (tm * tk + tk * tn) * in_isz
            + 2 * tm * tn * out_isz
            + 2 * tn * 4
            + tm * tn * 4)


def _select_tiles(M, N, K, in_isz, out_isz, budget, tm_hint, tn_hint):
    tm_cap = max(16, _round_up(M, 16))    # multiple of 16: bf16 sublane pack
    tn_cap = max(128, _round_up(N, 128))  # lane-dense output tiles
    tm_hint = max(16, min(tm_hint, tm_cap))
    tn_hint = max(128, min(tn_hint, tn_cap))

    tn_cands = [tn_hint] + [t for t in (1024, 512, 256, 128) if t < tn_hint]
    tm_cands = [tm_hint] + [t for t in (256, 128, 64, 32, 16) if t < tm_hint]
    # Only tile K with exact multiples-of-128 divisors: the ragged grid edge
    # must never land in the contraction dim (garbage K would be incorrect).
    tk_cands = [K] + [t for t in (2048, 1024, 512, 256, 128)
                      if t < K and K % t == 0]

    # Preference: keep tn large (activation re-streaming), keep K untiled
    # (weight streamed once per vocab tile), shrink tm, then tile K, then tn.
    for tn in tn_cands:
        for tk in tk_cands:
            for tm in tm_cands:
                if _tile_footprint(tm, tn, tk, in_isz, out_isz) <= budget:
                    return tm, tn, tk
    return min(128, tm_cap), min(128, tn_cap), tk_cands[-1]


def _make_spec(block_shape, index_map, buffer_count=None):
    # Deeper pipelining for streaming blocks; falls back cleanly if the
    # installed Pallas version has no pipeline_mode / Buffered support.
    if buffer_count is not None and hasattr(pl, "Buffered"):
        try:
            return pl.BlockSpec(block_shape, index_map,
                                pipeline_mode=pl.Buffered(buffer_count))
        except TypeError:
            pass
    return pl.BlockSpec(block_shape, index_map)


# ---------------------------------------------------------------------------
# One-time parameter prep (OUTSIDE the hot path)
# ---------------------------------------------------------------------------
def prepare_decoder_params(w, b, *, compute_dtype=None):
    """One-time decoder-parameter preparation.

    * Casts the vocab-sized weight to `compute_dtype` (e.g. bf16) once, so
      the hot path never re-reads + re-writes the f32 weight.
    * Pads the contraction dim up to 128 with zeros when nhid < 128 (keeps
      the MXU/lane utilization sane for toy shapes; no-op for real models).

    w: (nhid, ntoken)  b: (ntoken,)  ->  (w_prepped (Kp, ntoken), b2 (1, ntoken) f32)
    """
    K, N = w.shape
    if compute_dtype is not None:
        w = w.astype(compute_dtype)
    if K < 128:
        w = jnp.pad(w, ((0, 128 - K), (0, 0)))
    b2 = b.reshape(1, N).astype(jnp.float32)
    return w, b2


# ---------------------------------------------------------------------------
# Forward: decoded = (x.view(B*T, nhid) @ W + b).view(B, T, ntoken)
# ---------------------------------------------------------------------------
def linear_decoder(x, w, b2, *, tm=512, tn=2048, out_dtype=None):
    """x: (B, T, nhid); w: (Kp, ntoken) from prepare_decoder_params;
    b2: (1, ntoken) f32. Returns (B, T, ntoken) logits (dtype = x.dtype
    unless out_dtype is given, e.g. jnp.bfloat16 to halve logit writeback).
    """
    B, T, K = x.shape
    Kw, N = w.shape
    assert Kw >= K and b2.shape == (1, N)
    out_dtype = x.dtype if out_dtype is None else out_dtype
    M = B * T

    x2 = x.reshape(M, K)
    if x2.dtype != w.dtype:
        x2 = x2.astype(w.dtype)          # x is the small operand; cheap cast
    if Kw != K:                          # only for toy nhid < 128
        x2 = jnp.pad(x2, ((0, 0), (0, Kw - K)))

    in_isz = jnp.dtype(w.dtype).itemsize
    out_isz = jnp.dtype(out_dtype).itemsize

    vmem_cap = _vmem_capacity_bytes()
    vmem_limit = min(vmem_cap * 3 // 4, 112 * 1024 * 1024)
    budget = vmem_limit - 4 * 1024 * 1024      # compiler-scratch headroom

    tm, tn, tk = _select_tiles(M, N, Kw, in_isz, out_isz, budget, tm, tn)

    grid_n = pl.cdiv(N, tn)
    grid_m = pl.cdiv(M, tm)
    grid_k = Kw // tk                          # exact by construction

    # Deeper buffering only where it can help (long inner loop) and only on
    # the 128 MiB parts with footprint headroom.
    extra = tm * tk * in_isz + (tm * tn * out_isz if grid_k == 1 else 0)
    deep = (vmem_cap >= 96 * 1024 * 1024
            and grid_m * grid_k >= 4
            and _tile_footprint(tm, tn, tk, in_isz, out_isz) + extra <= budget)

    x_spec = _make_spec((tm, tk), lambda j, i, k: (i, k),
                        buffer_count=3 if deep else None)
    w_spec = pl.BlockSpec((tk, tn), lambda j, i, k: (k, j))
    b_spec = pl.BlockSpec((1, tn), lambda j, i, k: (0, j))
    o_spec = _make_spec((tm, tn), lambda j, i, k: (i, j),
                        buffer_count=3 if (deep and grid_k == 1) else None)

    cost = pl.CostEstimate(
        flops=2 * M * N * Kw,
        transcendentals=0,
        bytes_accessed=(x2.size * in_isz * grid_n
                        + w.size * in_isz * (1 if grid_k == 1 else grid_m)
                        + b2.size * 4
                        + M * N * out_isz),
    )

    out = pl.pallas_call(
        _linear_kernel,
        out_shape=jax.ShapeDtypeStruct((M, N), out_dtype),
        grid_spec=pltpu.PrefetchScalarGridSpec(
            num_scalar_prefetch=0,
            # N (vocab) tiles outermost: v7x megacore shards the vocab across
            # the two TensorCores (weight read once in aggregate), and for a
            # fixed j the weight/bias block indices are constant along the
            # inner M axis, so the weight stays VMEM-resident (streamed from
            # HBM once per vocab tile when grid_k == 1).
            grid=(grid_n, grid_m, grid_k),
            in_specs=[x_spec, w_spec, b_spec],
            out_specs=o_spec,
            scratch_shapes=[pltpu.VMEM((tm, tn), jnp.float32)],
        ),
        compiler_params=pltpu.CompilerParams(
            dimension_semantics=("parallel", "parallel", "arbitrary"),
            vmem_limit_bytes=int(vmem_limit),
        ),
        cost_estimate=cost,
    )(x2, w, b2)

    return out.reshape(B, T, N)


if __name__ == "__main__":
    # Small shapes consistent with the module's forward:
    #   inputs: (B, T, nhid) -> decoded: (B, T, ntoken)
    B, T, nhid, ntoken = 2, 8, 32, 256

    key = jax.random.PRNGKey(0)
    kx, kw = jax.random.split(key)

    # Deterministic parameter init mirroring LinearDecoder.init_weights():
    #   weight ~ U(-0.1, 0.1), bias = 0.
    initrange = 0.1
    w = jax.random.uniform(
        kw, (nhid, ntoken), dtype=jnp.float32, minval=-initrange, maxval=initrange
    )
    b = jnp.zeros((ntoken,), dtype=jnp.float32)
    x = jax.random.normal(kx, (B, T, nhid), dtype=jnp.float32)

    # Pure-JAX reference (same math as PyTorch's Linear on flattened input).
    ref = (x.reshape(B * T, nhid) @ w + b).reshape(B, T, ntoken)

    # --- f32 weights (one-time prep; no per-call pad/cast) ---------------
    w_f32, b2 = prepare_decoder_params(w, b)
    out = jax.block_until_ready(linear_decoder(x, w_f32, b2))
    assert out.shape == (B, T, ntoken)
    assert jnp.allclose(out, ref, atol=1e-5, rtol=1e-5)

    # --- bf16 weights, persistently stored (recommended on v5e/v6e/v7x) --
    w_bf16, b2 = prepare_decoder_params(w, b, compute_dtype=jnp.bfloat16)
    out_bf16 = jax.block_until_ready(linear_decoder(x, w_bf16, b2))
    assert out_bf16.shape == (B, T, ntoken)
    assert out_bf16.dtype == jnp.float32
    assert jnp.allclose(out_bf16, ref, atol=5e-2, rtol=5e-2)

    # --- optional bf16 logits (halves the logit writeback stream) --------
    out_lo = jax.block_until_ready(
        linear_decoder(x, w_bf16, b2, out_dtype=jnp.bfloat16)
    )
    assert out_lo.dtype == jnp.bfloat16
    assert jnp.allclose(out_lo.astype(jnp.float32), ref, atol=5e-2, rtol=5e-2)

    print("KERNEL_OK")
</pallas_src>

<mosaic_0001>
module attributes {stable_mosaic.version = 11 : i64} {
  func.func @_linear_kernel(%arg0: i32, %arg1: i32, %arg2: i32, %arg3: memref<16x128xf32, #tpu.memory_space<vmem>>, %arg4: memref<128x256xf32, #tpu.memory_space<vmem>>, %arg5: memref<1x256xf32, #tpu.memory_space<vmem>>, %arg6: memref<16x256xf32, #tpu.memory_space<vmem>>, %arg7: memref<16x256xf32, #tpu.memory_space<vmem>>) attributes {dimension_semantics = [#tpu.dimension_semantics<parallel>, #tpu.dimension_semantics<parallel>, #tpu.dimension_semantics<arbitrary>], iteration_bounds = array<i64: 1, 1, 1>, scalar_prefetch = 0 : i64, scratch_operands = 1 : i64, tpu.core_type = #tpu.core_type<tc>, window_params = [{transform_indices = @transform_0, window_bounds = array<i64: 16, 128>}, {transform_indices = @transform_1, window_bounds = array<i64: 128, 256>}, {transform_indices = @transform_2, window_bounds = array<i64: 1, 256>}, {transform_indices = @transform_3, window_bounds = array<i64: 16, 256>}]} {
    %c0_i32 = arith.constant 0 : i32
    %0 = arith.cmpi eq, %arg2, %c0_i32 : i32
    %1 = arith.extui %0 : i1 to i32
    %c0_i32_0 = arith.constant 0 : i32
    %2 = arith.cmpi ne, %1, %c0_i32_0 : i32
    scf.if %2 {
      %cst_10 = arith.constant 0.000000e+00 : f32
      %12 = vector.broadcast %cst_10 : f32 to vector<16x256xf32>
      %c0_11 = arith.constant 0 : index
      %c0_12 = arith.constant 0 : index
      %13 = vector.load %arg7[%c0_11, %c0_12] : memref<16x256xf32, #tpu.memory_space<vmem>>, vector<16x256xf32>
      tpu.vector_store %arg7[%c0_11, %c0_12], %12 {strides = array<i32>} : memref<16x256xf32, #tpu.memory_space<vmem>>, vector<16x256xf32>,
    } else {
    }
    %c0 = arith.constant 0 : index
    %c0_1 = arith.constant 0 : index
    %3 = vector.load %arg7[%c0, %c0_1] : memref<16x256xf32, #tpu.memory_space<vmem>>, vector<16x256xf32>
    %c0_2 = arith.constant 0 : index
    %c0_3 = arith.constant 0 : index
    %4 = vector.load %arg3[%c0_2, %c0_3] : memref<16x128xf32, #tpu.memory_space<vmem>>, vector<16x128xf32>
    %c0_4 = arith.constant 0 : index
    %c0_5 = arith.constant 0 : index
    %5 = vector.load %arg4[%c0_4, %c0_5] : memref<128x256xf32, #tpu.memory_space<vmem>>, vector<128x256xf32>
    %cst = arith.constant dense<0.000000e+00> : vector<16x256xf32>
    %6 = tpu.matmul %4, %5, %cst {dimension_numbers = #tpu.dot_dimension_numbers<[1], [0], [0], [1], [0, 0, 1, 1], [], []>} : vector<16x128xf32>, vector<128x256xf32>, vector<16x256xf32> -> vector<16x256xf32>
    %7 = arith.addf %3, %6 : vector<16x256xf32>
    %c0_6 = arith.constant 0 : index
    %c0_7 = arith.constant 0 : index
    %8 = vector.load %arg7[%c0_6, %c0_7] : memref<16x256xf32, #tpu.memory_space<vmem>>, vector<16x256xf32>
    tpu.vector_store %arg7[%c0_6, %c0_7], %7 {strides = array<i32>} : memref<16x256xf32, #tpu.memory_space<vmem>>, vector<16x256xf32>,
    %c0_i32_8 = arith.constant 0 : i32
    %9 = arith.cmpi eq, %arg2, %c0_i32_8 : i32
    %10 = arith.extui %9 : i1 to i32
    %c0_i32_9 = arith.constant 0 : i32
    %11 = arith.cmpi ne, %10, %c0_i32_9 : i32
    scf.if %11 {
      %c0_10 = arith.constant 0 : index
      %c0_11 = arith.constant 0 : index
      %12 = vector.load %arg7[%c0_10, %c0_11] : memref<16x256xf32, #tpu.memory_space<vmem>>, vector<16x256xf32>
      %c0_12 = arith.constant 0 : index
      %c0_13 = arith.constant 0 : index
      %13 = vector.load %arg5[%c0_12, %c0_13] : memref<1x256xf32, #tpu.memory_space<vmem>>, vector<1x256xf32>
      %14 = vector.broadcast %13 : vector<1x256xf32> to vector<16x256xf32>
      %15 = arith.addf %12, %14 : vector<16x256xf32>
      %c0_14 = arith.constant 0 : index
      %c0_15 = arith.constant 0 : index
      %16 = vector.load %arg6[%c0_14, %c0_15] : memref<16x256xf32, #tpu.memory_space<vmem>>, vector<16x256xf32>
      tpu.vector_store %arg6[%c0_14, %c0_15], %15 {strides = array<i32>} : memref<16x256xf32, #tpu.memory_space<vmem>>, vector<16x256xf32>,
    } else {
    }
    return
  }
  func.func @transform_0(%arg0: i32, %arg1: i32, %arg2: i32) -> (i32, i32) {
    %c0_i32 = arith.constant 0 : i32
    return %arg1, %arg2 : i32, i32
  }
  func.func @transform_1(%arg0: i32, %arg1: i32, %arg2: i32) -> (i32, i32) {
    %c0_i32 = arith.constant 0 : i32
    return %arg2, %arg0 : i32, i32
  }
  func.func @transform_2(%arg0: i32, %arg1: i32, %arg2: i32) -> (i32, i32) {
    %c0_i32 = arith.constant 0 : i32
    %c0_i32_0 = arith.constant 0 : i32
    return %c0_i32, %arg0 : i32, i32
  }
  func.func @transform_3(%arg0: i32, %arg1: i32, %arg2: i32) -> (i32, i32) {
    %c0_i32 = arith.constant 0 : i32
    return %arg1, %arg0 : i32, i32
  }
}

</mosaic_0001>

<llo_original>
// kernel: tpu_custom_call.1
$region0: #{tpu_custom_call.1}
  #allocation0 [shape = 'u32[]', space=smem, size = 0x4, offset = 0x4, fixed_abs, tag = 'smem constant byte address 0x4 - core index']
  #allocation1 [shape = 'u32[144,128]{1,0:T(1,128)}', space=vmem, size = 0x12000, scoped, tag = 'internal scratch']
  #allocation2 [shape = 'f32[16,256]{1,0:T(8,128)}', space=vmem, size = 0x4000, scoped, tag = 'scratch operand']
  %s0 = inlined_call_operand.hbm [shape: f32[16,128], index: 0, kind: input, shape index: {}]
  %s1 = inlined_call_operand.hbm [shape: f32[128,256], index: 1, kind: input, shape index: {}]
  %s2 = inlined_call_operand.vmem [shape: f32[1,256], index: 2, kind: input, shape index: {}]
  %s3 = inlined_call_operand.hbm [shape: f32[16,256], index: 3, kind: output, shape index: {}]
  %s4 = sld [smem:[#allocation0]]
  $region38: #{tpu_custom_call.1} parent=0
    _
  %s6 = ssub.s32 1, %s4
  %s7 = scalar_select 0, %s6, %s4
  $region1: #{tpu_custom_call.1} parent=0
    #allocation3 [shape = 'u8[8192]{0}', space=vmem, size = 0x2000, scoped, tag = 'input window, operand 0, single buffered']
    #allocation4 [shape = 's32[1]{0}', space=sflag, size = 0x4, scoped, tag = 'scoped memory for tpu_custom_call.1']
    #allocation5 [shape = 's32[1]{0}', space=sflag, size = 0x4, scoped, tag = 'scoped memory for tpu_custom_call.1']
    #allocation6 [shape = 'u8[131072]{0}', space=vmem, size = 0x20000, scoped, tag = 'input window, operand 1, single buffered']
    #allocation7 [shape = 's32[1]{0}', space=sflag, size = 0x4, scoped, tag = 'scoped memory for tpu_custom_call.1']
    #allocation8 [shape = 'u8[16384]{0}', space=vmem, size = 0x4000, scoped, tag = 'output window, operand 0, single buffered']
    %8 = vsyncpa [#allocation4], 0
    %9 = vsyncpa [#allocation7], 0
    %10 = vsyncpa [#allocation5], 0
    // Predicated region
    $region2: #{tpu_custom_call.1} parent=1 // pred_check
      _
    $region3: #{tpu_custom_call.1} parent=1 // pred_check_branch
      %12 = sbr.rel (0) target = $region5
    $region4: #{tpu_custom_call.1} parent=1 // pred_region
      %s14 = ssub.s32 256, 256
      %15 = vsyncadd [#allocation4], %s14
      %s16 = sshll.u32 [#allocation3], 4
      %s17 = int_to_ptr.vmem [resolvable:$true] %s16
      %22 = dma.hbm_to_vmem [thread:$0]  %s0, 256, %s17, [#allocation4], 128, 128, 8
    $region5: #{tpu_custom_call.1} parent=1 // pred_fallthru
      _
    // Predicated region
    $region6: #{tpu_custom_call.1} parent=1 // pred_check
      _
    $region7: #{tpu_custom_call.1} parent=1 // pred_check_branch
      %24 = sbr.rel (0) target = $region9
    $region8: #{tpu_custom_call.1} parent=1 // pred_region
      %s26 = ssub.s32 4096, 4096
      %27 = vsyncadd [#allocation7], %s26
      %s28 = sshll.u32 [#allocation6], 4
      %s29 = int_to_ptr.vmem [resolvable:$true] %s28
      %34 = dma.hbm_to_vmem [thread:$0]  %s1, 4096, %s29, [#allocation7], 256, 256, 16
    $region9: #{tpu_custom_call.1} parent=1 // pred_fallthru
      _
    // Predicated region
    $region10: #{tpu_custom_call.1} parent=1 // pred_check
      _
    $region11: #{tpu_custom_call.1} parent=1 // pred_check_branch
      %36 = sbr.rel (0) target = $region13
    $region12: #{tpu_custom_call.1} parent=1 // pred_region
      _
    $region13: #{tpu_custom_call.1} parent=1 // pred_fallthru
      _
    // Predicated region
    $region14: #{tpu_custom_call.1} parent=1 // pred_check
      _
    $region15: #{tpu_custom_call.1} parent=1 // pred_check_branch
      %38 = sbr.rel (0) target = $region17
    $region16: #{tpu_custom_call.1} parent=1 // pred_region
      %39 = dma.done [#allocation4], 256
    $region17: #{tpu_custom_call.1} parent=1 // pred_fallthru
      _
    // Predicated region
    $region18: #{tpu_custom_call.1} parent=1 // pred_check
      _
    $region19: #{tpu_custom_call.1} parent=1 // pred_check_branch
      %41 = sbr.rel (0) target = $region21
    $region20: #{tpu_custom_call.1} parent=1 // pred_region
      %42 = dma.done [#allocation7], 4096
    $region21: #{tpu_custom_call.1} parent=1 // pred_fallthru
      _
    %p43 = scmp.eq.s32.totalorder 0, 0
    // Predicated region
    $region22: #{tpu_custom_call.1} parent=1 // pred_check
      %p44 = pneg %p43
    $region23: #{tpu_custom_call.1} parent=1 // pred_check_branch
      %46 = sbr.rel (%p44) target = $region25
    $region24: #{tpu_custom_call.1} parent=1 // pred_region
      %47 = vst [vmem:[#allocation2] sm:$0xff] 0.0
      %48 = vst [vmem:[#allocation2 + $0x8] sm:$0xff] 0.0
      %49 = vst [vmem:[#allocation2 + $0x10] sm:$0xff] 0.0
      %50 = vst [vmem:[#allocation2 + $0x18] sm:$0xff] 0.0
    $region25: #{tpu_custom_call.1} parent=1 // pred_fallthru
      _
    %v51 = vld [vmem:[#allocation2] sm:$0xff]
    %v52 = vld [vmem:[#allocation2 + $0x8] sm:$0xff]
    %v53 = vld [vmem:[#allocation2 + $0x10] sm:$0xff]
    %v54 = vld [vmem:[#allocation2 + $0x18] sm:$0xff]
    %v55 = vld [vmem:[#allocation3] sm:$0xff]
    %v56 = vld [vmem:[#allocation3 + $0x8] sm:$0xff]
    %v57 = vld [vmem:[#allocation6] sm:$0xff]
    %v58 = vld [vmem:[#allocation6 + $0x8] sm:$0xff]
    %v59 = vld [vmem:[#allocation6 + $0x10] sm:$0xff]
    %v60 = vld [vmem:[#allocation6 + $0x18] sm:$0xff]
    %v61 = vld [vmem:[#allocation6 + $0x20] sm:$0xff]
    %v62 = vld [vmem:[#allocation6 + $0x28] sm:$0xff]
    %v63 = vld [vmem:[#allocation6 + $0x30] sm:$0xff]
    %v64 = vld [vmem:[#allocation6 + $0x38] sm:$0xff]
    %v65 = vld [vmem:[#allocation6 + $0x40] sm:$0xff]
    %v66 = vld [vmem:[#allocation6 + $0x48] sm:$0xff]
    %v67 = vld [vmem:[#allocation6 + $0x50] sm:$0xff]
    %v68 = vld [vmem:[#allocation6 + $0x58] sm:$0xff]
    %v69 = vld [vmem:[#allocation6 + $0x60] sm:$0xff]
    %v70 = vld [vmem:[#allocation6 + $0x68] sm:$0xff]
    %v71 = vld [vmem:[#allocation6 + $0x70] sm:$0xff]
    %v72 = vld [vmem:[#allocation6 + $0x78] sm:$0xff]
    %v73 = vld [vmem:[#allocation6 + $0x80] sm:$0xff]
    %v74 = vld [vmem:[#allocation6 + $0x88] sm:$0xff]
    %v75 = vld [vmem:[#allocation6 + $0x90] sm:$0xff]
    %v76 = vld [vmem:[#allocation6 + $0x98] sm:$0xff]
    %v77 = vld [vmem:[#allocation6 + $0xa0] sm:$0xff]
    %v78 = vld [vmem:[#allocation6 + $0xa8] sm:$0xff]
    %v79 = vld [vmem:[#allocation6 + $0xb0] sm:$0xff]
    %v80 = vld [vmem:[#allocation6 + $0xb8] sm:$0xff]
    %v81 = vld [vmem:[#allocation6 + $0xc0] sm:$0xff]
    %v82 = vld [vmem:[#allocation6 + $0xc8] sm:$0xff]
    %v83 = vld [vmem:[#allocation6 + $0xd0] sm:$0xff]
    %v84 = vld [vmem:[#allocation6 + $0xd8] sm:$0xff]
    %v85 = vld [vmem:[#allocation6 + $0xe0] sm:$0xff]
    %v86 = vld [vmem:[#allocation6 + $0xe8] sm:$0xff]
    %v87 = vld [vmem:[#allocation6 + $0xf0] sm:$0xff]
    %v88 = vld [vmem:[#allocation6 + $0xf8] sm:$0xff]
    %89 = vmatprep.subr.mxu0 %v88
    %90 = vmatpush1.msra.mxu0 %v87
    %91 = vmatprep.subr.mxu0 %v86
    %92 = vmatpush1.msra.mxu0 %v85
    %93 = vmatprep.subr.mxu0 %v84
    %94 = vmatpush1.msra.mxu0 %v83
    %95 = vmatprep.subr.mxu0 %v82
    %96 = vmatpush1.msra.mxu0 %v81
    %97 = vmatprep.subr.mxu0 %v80
    %98 = vmatpush1.msra.mxu0 %v79
    %99 = vmatprep.subr.mxu0 %v78
    %100 = vmatpush1.msra.mxu0 %v77
    %101 = vmatprep.subr.mxu0 %v76
    %102 = vmatpush1.msra.mxu0 %v75
    %103 = vmatprep.subr.mxu0 %v74
    %104 = vmatpush1.msra.mxu0 %v73
    %105 = vmatprep.subr.mxu0 %v72
    %106 = vmatpush1.msra.mxu0 %v71
    %107 = vmatprep.subr.mxu0 %v70
    %108 = vmatpush1.msra.mxu0 %v69
    %109 = vmatprep.subr.mxu0 %v68
    %110 = vmatpush1.msra.mxu0 %v67
    %111 = vmatprep.subr.mxu0 %v66
    %112 = vmatpush1.msra.mxu0 %v65
    %113 = vmatprep.subr.mxu0 %v64
    %114 = vmatpush1.msra.mxu0 %v63
    %115 = vmatprep.subr.mxu0 %v62
    %116 = vmatpush1.msra.mxu0 %v61
    %117 = vmatprep.subr.mxu0 %v60
    %118 = vmatpush1.msra.mxu0 %v59
    %119 = vmatprep.subr.mxu0 %v58
    %120 = vmatpush1.msra.mxu0 %v57
    %121 = vmatprep.subr.mxu0 0.0
    %122 = vmatpush2.msra.mxu0 0.0
    %123 = vmatprep.subr.mxu0 0.0
    %124 = vmatpush2.msra.mxu0 0.0
    %125 = vmatprep.subr.mxu0 0.0
    %126 = vmatpush2.msra.mxu0 0.0
    %127 = vmatprep.subr.mxu0 0.0
    %128 = vmatpush2.msra.mxu0 0.0
    %129 = vmatprep.subr.mxu0 0.0
    %130 = vmatpush2.msra.mxu0 0.0
    %131 = vmatprep.subr.mxu0 0.0
    %132 = vmatpush2.msra.mxu0 0.0
    %133 = vmatprep.subr.mxu0 0.0
    %134 = vmatpush2.msra.mxu0 0.0
    %135 = vmatprep.subr.mxu0 0.0
    %136 = vmatpush2.msra.mxu0 0.0
    %137 = vmatprep.subr.mxu0 0.0
    %138 = vmatpush2.msra.mxu0 0.0
    %139 = vmatprep.subr.mxu0 0.0
    %140 = vmatpush2.msra.mxu0 0.0
    %141 = vmatprep.subr.mxu0 0.0
    %142 = vmatpush2.msra.mxu0 0.0
    %143 = vmatprep.subr.mxu0 0.0
    %144 = vmatpush2.msra.mxu0 0.0
    %145 = vmatprep.subr.mxu0 0.0
    %146 = vmatpush2.msra.mxu0 0.0
    %147 = vmatprep.subr.mxu0 0.0
    %148 = vmatpush2.msra.mxu0 0.0
    %149 = vmatprep.subr.mxu0 0.0
    %150 = vmatpush2.msra.mxu0 0.0
    %151 = vmatprep.subr.mxu0 0.0
    %152 = vmatpush2.msra.mxu0 0.0
    %153 = vmatprep.mubr.f32.mxu0 0.0
    %154 = vmatmul.mubr.f32.gmra.mxu0 %v55
    %v155 = vpop.f32.mrf.mxu0
    %v156 = vadd.f32 0.0, %v155
    %v157 = vpop.f32.mrf.mxu0
    %v158 = vadd.f32 0.0, %v157
    %159 = vmatprep.mubr.f32.mxu0 0.0
    %160 = vmatmul.mubr.f32.gmra.mxu0 %v56
    %v161 = vpop.f32.mrf.mxu0
    %v162 = vadd.f32 0.0, %v161
    %v163 = vpop.f32.mrf.mxu0
    %v164 = vadd.f32 0.0, %v163
    %165 = vdwg.mxu0
    %v166 = vadd.f32 %v51, %v156
    %v167 = vadd.f32 %v52, %v158
    %v168 = vadd.f32 %v53, %v162
    %v169 = vadd.f32 %v54, %v164
    %170 = vst [vmem:[#allocation2] sm:$0xff] %v166
    %171 = vst [vmem:[#allocation2 + $0x8] sm:$0xff] %v167
    %172 = vst [vmem:[#allocation2 + $0x10] sm:$0xff] %v168
    %173 = vst [vmem:[#allocation2 + $0x18] sm:$0xff] %v169
    // Predicated region
    $region26: #{tpu_custom_call.1} parent=1 // pred_check
      %p174 = pneg %p43
    $region27: #{tpu_custom_call.1} parent=1 // pred_check_branch
      %176 = sbr.rel (%p174) target = $region29
    $region28: #{tpu_custom_call.1} parent=1 // pred_region
      %v177 = vld [vmem:[#allocation2] sm:$0xff]
      %v178 = vld [vmem:[#allocation2 + $0x8] sm:$0xff]
      %v179 = vld [vmem:[#allocation2 + $0x10] sm:$0xff]
      %v180 = vld [vmem:[#allocation2 + $0x18] sm:$0xff]
      %v181 = vld [vmem:[%s2] sm:$0x3]
      %v183 = vlaneseq
      %v184 = vshrl.u32 %v183, 7
      %v185 = vsub.s32 0, %v184
      %v186 = vrot.slane %v181, %v185
      %v187 = vlaneseq
      %v188 = vshrl.u32 %v187, 7
      %v189 = vsub.s32 1, %v188
      %v190 = vrot.slane %v181, %v189
      %v193 = vadd.f32 %v177, %v186
      %v194 = vadd.f32 %v178, %v190
      %v195 = vadd.f32 %v179, %v186
      %v196 = vadd.f32 %v180, %v190
      %197 = vst [vmem:[#allocation8] sm:$0xff] %v193
      %198 = vst [vmem:[#allocation8 + $0x8] sm:$0xff] %v194
      %199 = vst [vmem:[#allocation8 + $0x10] sm:$0xff] %v195
      %200 = vst [vmem:[#allocation8 + $0x18] sm:$0xff] %v196
    $region29: #{tpu_custom_call.1} parent=1 // pred_fallthru
      _
    // Predicated region
    $region30: #{tpu_custom_call.1} parent=1 // pred_check
      _
    $region31: #{tpu_custom_call.1} parent=1 // pred_check_branch
      %202 = sbr.rel (0) target = $region33
    $region32: #{tpu_custom_call.1} parent=1 // pred_region
      %s204 = ssub.s32 512, 512
      %205 = vsyncadd [#allocation5], %s204
      %s206 = sshll.u32 [#allocation8], 4
      %s207 = int_to_ptr.vmem [resolvable:$true] %s206
      %212 = dma.vmem_to_hbm [thread:$0]  %s207, 512, %s3, [#allocation5], 256, 256, 16
    $region33: #{tpu_custom_call.1} parent=1 // pred_fallthru
      _
    // Predicated region
    $region34: #{tpu_custom_call.1} parent=1 // pred_check
      _
    $region35: #{tpu_custom_call.1} parent=1 // pred_check_branch
      %214 = sbr.rel (0) target = $region37
    $region36: #{tpu_custom_call.1} parent=1 // pred_region
      %215 = dma.done [#allocation5], 512
    $region37: #{tpu_custom_call.1} parent=1 // pred_fallthru
      _
    %216 = vsyncpa [#allocation4], 1
    %217 = vsyncpa [#allocation7], 1
    %218 = vsyncpa [#allocation5], 1

</llo_original>
